<compile_context>
chip_gen: v5e
topology: v5e:2x2
jax: 0.10.0
libtpu: 0.0.40
codegen_flags: <defaults>
</compile_context>

<pallas_src>
import jax
import jax.numpy as jnp
from jax.experimental import pallas as pl
from jax.experimental.pallas import tpu as pltpu

_LANE = 128      # lane width (last-dim tiling unit)
_SUBLANE = 8     # f32 sublane width (second-to-last-dim tiling unit)
_MXU_M = 256     # full MXU M tile on v6e/v7x (also a multiple of v5e's 128)


def _round_up(x, m):
    return (x + m - 1) // m * m


def _cdiv(a, b):
    return (a + b - 1) // b


def _choose_batch_tile(B, batch_tile):
    """Pick the batch tile: big enough to amortize per-step overhead, snapped to
    the MXU M width for large batches, and capped so there are >= 2 grid steps
    (lets dimension_semantics=("parallel",) use both TensorCores on v7x)."""
    B_ceil = _round_up(B, _SUBLANE)
    if B_ceil <= batch_tile:
        # Small batch: single grid step covering the whole (sublane-aligned) batch.
        return B_ceil
    snap = _MXU_M if batch_tile >= _MXU_M else _SUBLANE
    tb = min(batch_tile, _round_up(_cdiv(B_ceil, 2), snap))
    return _round_up(tb, snap)


def _policy_mlp_kernel(x_ref, w1_ref, b1_ref, w2_ref, b2_ref, w3_ref, b3_ref, o_ref):
    # Weights arrive already in bf16 (pre-cast in the wrapper); only the
    # per-tile activations are cast here. MXU matmuls accumulate in f32;
    # bias-add / ReLU stay in f32 on the VPU.
    x = x_ref[...].astype(jnp.bfloat16)

    # Layer 1: Linear + ReLU.
    h1 = jnp.dot(x, w1_ref[...], preferred_element_type=jnp.float32)
    h1 = jnp.maximum(h1 + b1_ref[...], 0.0).astype(jnp.bfloat16)

    # Layer 2: Linear + ReLU.
    h2 = jnp.dot(h1, w2_ref[...], preferred_element_type=jnp.float32)
    h2 = jnp.maximum(h2 + b2_ref[...], 0.0).astype(jnp.bfloat16)

    # Layer 3: Linear (no activation). Bias-add + cast fused into the store.
    o_ref[...] = (jnp.dot(h2, w3_ref[...], preferred_element_type=jnp.float32)
                  + b3_ref[...]).astype(o_ref.dtype)


def policy_network_forward(state, params, *, batch_tile=1024):
    """state: [B, state_dim] float32. params: dict of (w1,b1,w2,b2,w3,b3)."""
    # Pre-cast weights to bf16 once (resident operands, reused by every grid
    # step). For repeated inference, callers can store params in bf16 to make
    # even this one-time cast disappear.
    w1 = params["w1"].astype(jnp.bfloat16)
    w2 = params["w2"].astype(jnp.bfloat16)
    w3 = params["w3"].astype(jnp.bfloat16)
    b1, b2, b3 = params["b1"], params["b2"], params["b3"]

    B, S = state.shape
    H = w1.shape[1]
    A = w3.shape[1]

    # Output feature handling:
    #   A < 128  -> keep the true A (block == full array dim is legal); avoids
    #               128/A x write amplification and keeps f32 output precision.
    #   A >= 128 -> pad to a multiple of 128 so stores stay lane-dense.
    if A >= _LANE:
        A_out = _round_up(A, _LANE)
        if A_out != A:
            w3 = jnp.pad(w3, ((0, 0), (0, A_out - A)))
            b3 = jnp.pad(b3, ((0, 0), (0, A_out - A)))
    else:
        A_out = A

    # Batch tiling.
    tb = _choose_batch_tile(B, batch_tile)
    B_pad = _round_up(B, tb)
    if B_pad != B:
        state = jnp.pad(state, ((0, B_pad - B), (0, 0)))

    grid = (B_pad // tb,)

    def resident(shape):
        # Weight/bias blocks: block index invariant in the grid -> DMA'd once,
        # VMEM-resident for all batch tiles.
        return pl.BlockSpec(shape, lambda i: (0, 0))

    out = pl.pallas_call(
        _policy_mlp_kernel,
        out_shape=jax.ShapeDtypeStruct((B_pad, A_out), state.dtype),
        grid=grid,
        in_specs=[
            pl.BlockSpec((tb, S), lambda i: (i, 0)),     # batch tile of states
            resident((S, H)), resident((1, H)),          # layer 1 W (bf16), b (f32)
            resident((H, H)), resident((1, H)),          # layer 2 W (bf16), b (f32)
            resident((H, A_out)), resident((1, A_out)),  # layer 3 W (bf16), b (f32)
        ],
        out_specs=pl.BlockSpec((tb, A_out), lambda i: (i, 0)),
        compiler_params=pltpu.CompilerParams(
            dimension_semantics=("parallel",)),
    )(state, w1, b1, w2, b2, w3, b3)

    if B_pad != B:
        out = out[:B]
    if A_out != A:
        out = out[:, :A]
    return out


def init_params(key, state_dim, action_dim, hidden_dim=256, dtype=jnp.float32):
    """Deterministic init mimicking PyTorch nn.Linear default U(-1/sqrt(fan_in), 1/sqrt(fan_in))."""
    ks = jax.random.split(key, 6)

    def lin(kw, kb, fan_in, fan_out):
        bound = 1.0 / jnp.sqrt(jnp.asarray(fan_in, dtype))
        w = jax.random.uniform(kw, (fan_in, fan_out), dtype, -bound, bound)
        b = jax.random.uniform(kb, (1, fan_out), dtype, -bound, bound)
        return w, b

    w1, b1 = lin(ks[0], ks[1], state_dim, hidden_dim)
    w2, b2 = lin(ks[2], ks[3], hidden_dim, hidden_dim)
    w3, b3 = lin(ks[4], ks[5], hidden_dim, action_dim)
    return {"w1": w1, "b1": b1, "w2": w2, "b2": b2, "w3": w3, "b3": b3}


def _reference(state, p):
    h1 = jnp.maximum(state @ p["w1"] + p["b1"], 0.0)
    h2 = jnp.maximum(h1 @ p["w2"] + p["b2"], 0.0)
    return h2 @ p["w3"] + p["b3"]


if __name__ == "__main__":
    key = jax.random.PRNGKey(0)
    k_state, k_params, k_mid, k_big = jax.random.split(key, 4)

    # Small demo shapes (single grid step, unpadded output path).
    batch, state_dim, action_dim, hidden_dim = 8, 16, 8, 32
    state = jax.random.normal(k_state, (batch, state_dim), jnp.float32)
    params = init_params(k_params, state_dim, action_dim, hidden_dim)

    out = jax.block_until_ready(policy_network_forward(state, params))
    ref = _reference(state, params)
    assert out.shape == (batch, action_dim)
    # bf16 matmul inputs with f32 accumulation -> relaxed tolerance vs f32 ref.
    assert jnp.allclose(out, ref, atol=5e-2, rtol=5e-2)

    # Medium, non-divisible batch: exercises sublane padding in a single step.
    mid_batch = 300
    mid_state = jax.random.normal(k_mid, (mid_batch, state_dim), jnp.float32)
    mid_out = jax.block_until_ready(policy_network_forward(mid_state, params))
    mid_ref = _reference(mid_state, params)
    assert mid_out.shape == (mid_batch, action_dim)
    assert jnp.allclose(mid_out, mid_ref, atol=5e-2, rtol=5e-2)

    # Large batch: exercises the multi-step grid (>= 2 parallel steps) and
    # MXU-snapped batch tiles.
    big_batch = 2500
    big_state = jax.random.normal(k_big, (big_batch, state_dim), jnp.float32)
    big_out = jax.block_until_ready(policy_network_forward(big_state, params))
    big_ref = _reference(big_state, params)
    assert big_out.shape == (big_batch, action_dim)
    assert jnp.allclose(big_out, big_ref, atol=5e-2, rtol=5e-2)

    print("KERNEL_OK")
</pallas_src>

<mosaic_0001>
module attributes {stable_mosaic.version = 11 : i64} {
  func.func @_policy_mlp_kernel(%arg0: i32, %arg1: memref<8x16xf32, #tpu.memory_space<vmem>>, %arg2: memref<16x32xbf16, #tpu.memory_space<vmem>>, %arg3: memref<1x32xf32, #tpu.memory_space<vmem>>, %arg4: memref<32x32xbf16, #tpu.memory_space<vmem>>, %arg5: memref<1x32xf32, #tpu.memory_space<vmem>>, %arg6: memref<32x8xbf16, #tpu.memory_space<vmem>>, %arg7: memref<1x8xf32, #tpu.memory_space<vmem>>, %arg8: memref<8x8xf32, #tpu.memory_space<vmem>>) attributes {dimension_semantics = [#tpu.dimension_semantics<parallel>], iteration_bounds = array<i64: 1>, scalar_prefetch = 0 : i64, scratch_operands = 0 : i64, tpu.core_type = #tpu.core_type<tc>, window_params = [{transform_indices = @transform_0, window_bounds = array<i64: 8, 16>}, {pipeline_mode = #tpu.pipeline_mode<synchronous>, transform_indices = @transform_1, window_bounds = array<i64: 16, 32>}, {pipeline_mode = #tpu.pipeline_mode<synchronous>, transform_indices = @transform_2, window_bounds = array<i64: 1, 32>}, {pipeline_mode = #tpu.pipeline_mode<synchronous>, transform_indices = @transform_3, window_bounds = array<i64: 32, 32>}, {pipeline_mode = #tpu.pipeline_mode<synchronous>, transform_indices = @transform_4, window_bounds = array<i64: 1, 32>}, {pipeline_mode = #tpu.pipeline_mode<synchronous>, transform_indices = @transform_5, window_bounds = array<i64: 32, 8>}, {pipeline_mode = #tpu.pipeline_mode<synchronous>, transform_indices = @transform_6, window_bounds = array<i64: 1, 8>}, {transform_indices = @transform_7, window_bounds = array<i64: 8, 8>}]} {
    %c0 = arith.constant 0 : index
    %c0_0 = arith.constant 0 : index
    %0 = vector.load %arg1[%c0, %c0_0] : memref<8x16xf32, #tpu.memory_space<vmem>>, vector<8x16xf32>
    %1 = arith.truncf %0 : vector<8x16xf32> to vector<8x16xbf16>
    %c0_1 = arith.constant 0 : index
    %c0_2 = arith.constant 0 : index
    %2 = vector.load %arg2[%c0_1, %c0_2] : memref<16x32xbf16, #tpu.memory_space<vmem>>, vector<16x32xbf16>
    %cst = arith.constant dense<0.000000e+00> : vector<8x32xf32>
    %3 = tpu.matmul %1, %2, %cst {dimension_numbers = #tpu.dot_dimension_numbers<[1], [0], [0], [1], [0, 0, 1, 1], [], []>} : vector<8x16xbf16>, vector<16x32xbf16>, vector<8x32xf32> -> vector<8x32xf32>
    %c0_3 = arith.constant 0 : index
    %c0_4 = arith.constant 0 : index
    %4 = vector.load %arg3[%c0_3, %c0_4] : memref<1x32xf32, #tpu.memory_space<vmem>>, vector<1x32xf32>
    %5 = vector.broadcast %4 : vector<1x32xf32> to vector<8x32xf32>
    %6 = arith.addf %3, %5 : vector<8x32xf32>
    %cst_5 = arith.constant 0.000000e+00 : f32
    %7 = vector.broadcast %cst_5 : f32 to vector<8x32xf32>
    %8 = arith.maximumf %6, %7 : vector<8x32xf32>
    %9 = arith.truncf %8 : vector<8x32xf32> to vector<8x32xbf16>
    %c0_6 = arith.constant 0 : index
    %c0_7 = arith.constant 0 : index
    %10 = vector.load %arg4[%c0_6, %c0_7] : memref<32x32xbf16, #tpu.memory_space<vmem>>, vector<32x32xbf16>
    %cst_8 = arith.constant dense<0.000000e+00> : vector<8x32xf32>
    %11 = tpu.matmul %9, %10, %cst_8 {dimension_numbers = #tpu.dot_dimension_numbers<[1], [0], [0], [1], [0, 0, 1, 1], [], []>} : vector<8x32xbf16>, vector<32x32xbf16>, vector<8x32xf32> -> vector<8x32xf32>
    %c0_9 = arith.constant 0 : index
    %c0_10 = arith.constant 0 : index
    %12 = vector.load %arg5[%c0_9, %c0_10] : memref<1x32xf32, #tpu.memory_space<vmem>>, vector<1x32xf32>
    %13 = vector.broadcast %12 : vector<1x32xf32> to vector<8x32xf32>
    %14 = arith.addf %11, %13 : vector<8x32xf32>
    %cst_11 = arith.constant 0.000000e+00 : f32
    %15 = vector.broadcast %cst_11 : f32 to vector<8x32xf32>
    %16 = arith.maximumf %14, %15 : vector<8x32xf32>
    %17 = arith.truncf %16 : vector<8x32xf32> to vector<8x32xbf16>
    %c0_12 = arith.constant 0 : index
    %c0_13 = arith.constant 0 : index
    %18 = vector.load %arg6[%c0_12, %c0_13] : memref<32x8xbf16, #tpu.memory_space<vmem>>, vector<32x8xbf16>
    %cst_14 = arith.constant dense<0.000000e+00> : vector<8x8xf32>
    %19 = tpu.matmul %17, %18, %cst_14 {dimension_numbers = #tpu.dot_dimension_numbers<[1], [0], [0], [1], [0, 0, 1, 1], [], []>} : vector<8x32xbf16>, vector<32x8xbf16>, vector<8x8xf32> -> vector<8x8xf32>
    %c0_15 = arith.constant 0 : index
    %c0_16 = arith.constant 0 : index
    %20 = vector.load %arg7[%c0_15, %c0_16] : memref<1x8xf32, #tpu.memory_space<vmem>>, vector<1x8xf32>
    %21 = vector.broadcast %20 : vector<1x8xf32> to vector<8x8xf32>
    %22 = arith.addf %19, %21 : vector<8x8xf32>
    %c0_17 = arith.constant 0 : index
    %c0_18 = arith.constant 0 : index
    %23 = vector.load %arg8[%c0_17, %c0_18] : memref<8x8xf32, #tpu.memory_space<vmem>>, vector<8x8xf32>
    tpu.vector_store %arg8[%c0_17, %c0_18], %22 {strides = array<i32>} : memref<8x8xf32, #tpu.memory_space<vmem>>, vector<8x8xf32>,
    return
  }
  func.func @transform_0(%arg0: i32) -> (i32, i32) {
    %c0_i32 = arith.constant 0 : i32
    %c0_i32_0 = arith.constant 0 : i32
    return %arg0, %c0_i32 : i32, i32
  }
  func.func @transform_1(%arg0: i32) -> (i32, i32) {
    %c0_i32 = arith.constant 0 : i32
    %c0_i32_0 = arith.constant 0 : i32
    %c0_i32_1 = arith.constant 0 : i32
    return %c0_i32, %c0_i32_0 : i32, i32
  }
  func.func @transform_2(%arg0: i32) -> (i32, i32) {
    %c0_i32 = arith.constant 0 : i32
    %c0_i32_0 = arith.constant 0 : i32
    %c0_i32_1 = arith.constant 0 : i32
    return %c0_i32, %c0_i32_0 : i32, i32
  }
  func.func @transform_3(%arg0: i32) -> (i32, i32) {
    %c0_i32 = arith.constant 0 : i32
    %c0_i32_0 = arith.constant 0 : i32
    %c0_i32_1 = arith.constant 0 : i32
    return %c0_i32, %c0_i32_0 : i32, i32
  }
  func.func @transform_4(%arg0: i32) -> (i32, i32) {
    %c0_i32 = arith.constant 0 : i32
    %c0_i32_0 = arith.constant 0 : i32
    %c0_i32_1 = arith.constant 0 : i32
    return %c0_i32, %c0_i32_0 : i32, i32
  }
  func.func @transform_5(%arg0: i32) -> (i32, i32) {
    %c0_i32 = arith.constant 0 : i32
    %c0_i32_0 = arith.constant 0 : i32
    %c0_i32_1 = arith.constant 0 : i32
    return %c0_i32, %c0_i32_0 : i32, i32
  }
  func.func @transform_6(%arg0: i32) -> (i32, i32) {
    %c0_i32 = arith.constant 0 : i32
    %c0_i32_0 = arith.constant 0 : i32
    %c0_i32_1 = arith.constant 0 : i32
    return %c0_i32, %c0_i32_0 : i32, i32
  }
  func.func @transform_7(%arg0: i32) -> (i32, i32) {
    %c0_i32 = arith.constant 0 : i32
    %c0_i32_0 = arith.constant 0 : i32
    return %arg0, %c0_i32 : i32, i32
  }
}

</mosaic_0001>

<llo_original>
// kernel: tpu_custom_call.1
$region0: #{tpu_custom_call.1}
  #allocation0 [shape = 'u32[]', space=smem, size = 0x4, offset = 0x4, fixed_abs, tag = 'smem constant byte address 0x4 - core index']
  #allocation1 [shape = 'u32[72,128]{1,0:T(1,128)}', space=vmem, size = 0x9000, scoped, tag = 'internal scratch']
  %s0 = inlined_call_operand.hbm [shape: f32[8,16], index: 0, kind: input, shape index: {}]
  %s1 = inlined_call_operand.hbm [shape: bf16[16,32], index: 1, kind: input, shape index: {}]
  %s2 = inlined_call_operand.vmem [shape: f32[1,32], index: 2, kind: input, shape index: {}]
  %s3 = inlined_call_operand.vmem [shape: bf16[32,32], index: 3, kind: input, shape index: {}]
  %s4 = inlined_call_operand.vmem [shape: f32[1,32], index: 4, kind: input, shape index: {}]
  %s5 = inlined_call_operand.vmem [shape: bf16[32,8], index: 5, kind: input, shape index: {}]
  %s6 = inlined_call_operand.vmem [shape: f32[1,8], index: 6, kind: input, shape index: {}]
  %s7 = inlined_call_operand.hbm [shape: f32[8,8], index: 7, kind: output, shape index: {}]
  %s8 = sld [smem:[#allocation0]]
  $region46: #{tpu_custom_call.1} parent=0
    _
  %s10 = ssub.s32 1, %s8
  %s11 = scalar_select 0, %s10, %s8
  $region1: #{tpu_custom_call.1} parent=0
    #allocation2 [shape = 'u8[4096]{0}', space=vmem, size = 0x1000, scoped, tag = 'input window, operand 0, single buffered']
    #allocation3 [shape = 's32[1]{0}', space=sflag, size = 0x4, scoped, tag = 'scoped memory for tpu_custom_call.1']
    #allocation4 [shape = 's32[1]{0}', space=sflag, size = 0x4, scoped, tag = 'scoped memory for tpu_custom_call.1']
    #allocation5 [shape = 'u8[4096]{0}', space=vmem, size = 0x1000, scoped, tag = 'input window, operand 1, single buffered']
    #allocation6 [shape = 's32[1]{0}', space=sflag, size = 0x4, scoped, tag = 'scoped memory for tpu_custom_call.1']
    #allocation7 [shape = 'u8[4096]{0}', space=vmem, size = 0x1000, scoped, tag = 'output window, operand 0, single buffered']
    %12 = vsyncpa [#allocation3], 0
    %13 = vsyncpa [#allocation6], 0
    %14 = vsyncpa [#allocation4], 0
    // Predicated region
    $region2: #{tpu_custom_call.1} parent=1 // pred_check
      _
    $region3: #{tpu_custom_call.1} parent=1 // pred_check_branch
      %16 = sbr.rel (0) target = $region5
    $region4: #{tpu_custom_call.1} parent=1 // pred_region
      %18 = vsyncadd [#allocation3], 0
      %s20 = sshll.u32 %s0, 4
      %s21 = int_to_ptr.hbm [resolvable:$true] %s20
      %s22 = sshll.u32 [#allocation2], 4
      %s23 = int_to_ptr.vmem [resolvable:$true] %s22
      %25 = dma.hbm_to_vmem [thread:$0]  %s21, 128, %s23, [#allocation3]
    $region5: #{tpu_custom_call.1} parent=1 // pred_fallthru
      _
    // Predicated region
    $region6: #{tpu_custom_call.1} parent=1 // pred_check
      _
    $region7: #{tpu_custom_call.1} parent=1 // pred_check_branch
      %27 = sbr.rel (0) target = $region9
    $region8: #{tpu_custom_call.1} parent=1 // pred_region
      %29 = vsyncadd [#allocation6], 0
      %s30 = sshll.u32 %s1, 4
      %s31 = int_to_ptr.hbm [resolvable:$true] %s30
      %s32 = sshll.u32 [#allocation5], 4
      %s33 = int_to_ptr.vmem [resolvable:$true] %s32
      %38 = dma.hbm_to_vmem [thread:$0]  %s31, 128, %s33, [#allocation6], 64, 64, 4
    $region9: #{tpu_custom_call.1} parent=1 // pred_fallthru
      _
    // Predicated region
    $region10: #{tpu_custom_call.1} parent=1 // pred_check
      _
    $region11: #{tpu_custom_call.1} parent=1 // pred_check_branch
      %40 = sbr.rel (0) target = $region13
    $region12: #{tpu_custom_call.1} parent=1 // pred_region
      _
    $region13: #{tpu_custom_call.1} parent=1 // pred_fallthru
      _
    // Predicated region
    $region14: #{tpu_custom_call.1} parent=1 // pred_check
      _
    $region15: #{tpu_custom_call.1} parent=1 // pred_check_branch
      %42 = sbr.rel (0) target = $region17
    $region16: #{tpu_custom_call.1} parent=1 // pred_region
      _
    $region17: #{tpu_custom_call.1} parent=1 // pred_fallthru
      _
    // Predicated region
    $region18: #{tpu_custom_call.1} parent=1 // pred_check
      _
    $region19: #{tpu_custom_call.1} parent=1 // pred_check_branch
      %44 = sbr.rel (0) target = $region21
    $region20: #{tpu_custom_call.1} parent=1 // pred_region
      _
    $region21: #{tpu_custom_call.1} parent=1 // pred_fallthru
      _
    // Predicated region
    $region22: #{tpu_custom_call.1} parent=1 // pred_check
      _
    $region23: #{tpu_custom_call.1} parent=1 // pred_check_branch
      %46 = sbr.rel (0) target = $region25
    $region24: #{tpu_custom_call.1} parent=1 // pred_region
      _
    $region25: #{tpu_custom_call.1} parent=1 // pred_fallthru
      _
    // Predicated region
    $region26: #{tpu_custom_call.1} parent=1 // pred_check
      _
    $region27: #{tpu_custom_call.1} parent=1 // pred_check_branch
      %48 = sbr.rel (0) target = $region29
    $region28: #{tpu_custom_call.1} parent=1 // pred_region
      _
    $region29: #{tpu_custom_call.1} parent=1 // pred_fallthru
      _
    // Predicated region
    $region30: #{tpu_custom_call.1} parent=1 // pred_check
      _
    $region31: #{tpu_custom_call.1} parent=1 // pred_check_branch
      %50 = sbr.rel (0) target = $region33
    $region32: #{tpu_custom_call.1} parent=1 // pred_region
      %52 = dma.done [#allocation3], 128
    $region33: #{tpu_custom_call.1} parent=1 // pred_fallthru
      _
    // Predicated region
    $region34: #{tpu_custom_call.1} parent=1 // pred_check
      _
    $region35: #{tpu_custom_call.1} parent=1 // pred_check_branch
      %54 = sbr.rel (0) target = $region37
    $region36: #{tpu_custom_call.1} parent=1 // pred_region
      %56 = dma.done [#allocation6], 128
    $region37: #{tpu_custom_call.1} parent=1 // pred_fallthru
      _
    %v58 = vld [vmem:[#allocation2] sm:$0xff]
    %v59 = vpack.c.bf16 %v58, %v58
    %v60 = vld [vmem:[#allocation5] sm:$0xf]
    %v61 = vld [vmem:[#allocation5 + $0x4] sm:$0xf]
    %v62 = vld [vmem:[%s2] sm:$0x1]
    %v64 = vperm.slane %v62, 0
    %v68 = vunpack.c.l.b16 %v60
    %v69 = vunpack.c.l.b16 %v61
    %v70 = vpack.c.b16 %v69, %v68
    %vm72 = vcmask 130048
    %v74 = vsel %vm72, %v59, 0
    %76 = vmatpush.bf16.msra.mxu0 0
    %77 = vmatpush.bf16.msra.mxu0 0
    %78 = vmatpush.bf16.msra.mxu0 0
    %79 = vmatpush.bf16.msra.mxu0 0
    %80 = vmatpush.bf16.msra.mxu0 0
    %81 = vmatpush.bf16.msra.mxu0 0
    %82 = vmatpush.bf16.msra.mxu0 0
    %83 = vmatpush.bf16.msra.mxu0 %v70
    %84 = vmatmul.bf16.gmra.mxu0 %v74
    %v85 = vpop.f32.mrf.mxu0
    %v86 = vadd.f32 %v64, %v85
    %v87 = vpop.f32.mrf.mxu0
    %88 = vdwg.mxu0
    %v89 = vmax.f32 %v86, 0.0
    %v90 = vpack.c.bf16 %v89, %v89
    %v91 = vld [vmem:[%s3] sm:$0xf]
    %v92 = vld [vmem:[%s3 + $0x4] sm:$0xf]
    %v93 = vld [vmem:[%s3 + $0x8] sm:$0xf]
    %v94 = vld [vmem:[%s3 + $0xc] sm:$0xf]
    %v95 = vld [vmem:[%s4] sm:$0x1]
    %v97 = vperm.slane %v95, 0
    %v103 = vunpack.c.l.b16 %v91
    %v104 = vunpack.c.l.b16 %v92
    %v105 = vunpack.c.l.b16 %v93
    %v106 = vunpack.c.l.b16 %v94
    %v107 = vpack.c.b16 %v104, %v103
    %v108 = vpack.c.b16 %v106, %v105
    %vm111 = vcmask 261120
    %v113 = vsel %vm111, %v90, 0
    %115 = vmatpush.bf16.msra.mxu0 0
    %116 = vmatpush.bf16.msra.mxu0 0
    %117 = vmatpush.bf16.msra.mxu0 0
    %118 = vmatpush.bf16.msra.mxu0 0
    %119 = vmatpush.bf16.msra.mxu0 0
    %120 = vmatpush.bf16.msra.mxu0 0
    %121 = vmatpush.bf16.msra.mxu0 %v108
    %122 = vmatpush.bf16.msra.mxu0 %v107
    %123 = vmatmul.bf16.gmra.mxu0 %v113
    %v124 = vpop.f32.mrf.mxu0
    %v125 = vadd.f32 %v97, %v124
    %v126 = vpop.f32.mrf.mxu0
    %127 = vdwg.mxu0
    %v128 = vmax.f32 %v125, 0.0
    %v129 = vpack.c.bf16 %v128, %v128
    %v130 = vld [vmem:[%s5] sm:$0xf]
    %v131 = vld [vmem:[%s5 + $0x4] sm:$0xf]
    %v132 = vld [vmem:[%s5 + $0x8] sm:$0xf]
    %v133 = vld [vmem:[%s5 + $0xc] sm:$0xf]
    %v134 = vld [vmem:[%s6] sm:$0x1]
    %v136 = vperm.slane %v134, 0
    %v142 = vunpack.c.l.b16 %v130
    %v143 = vunpack.c.l.b16 %v131
    %v144 = vunpack.c.l.b16 %v132
    %v145 = vunpack.c.l.b16 %v133
    %v146 = vpack.c.b16 %v143, %v142
    %v147 = vpack.c.b16 %v145, %v144
    %v151 = vsel %vm111, %v129, 0
    %153 = vmatpush.bf16.msra.mxu0 0
    %154 = vmatpush.bf16.msra.mxu0 0
    %155 = vmatpush.bf16.msra.mxu0 0
    %156 = vmatpush.bf16.msra.mxu0 0
    %157 = vmatpush.bf16.msra.mxu0 0
    %158 = vmatpush.bf16.msra.mxu0 0
    %159 = vmatpush.bf16.msra.mxu0 %v147
    %160 = vmatpush.bf16.msra.mxu0 %v146
    %161 = vmatmul.bf16.gmra.mxu0 %v151
    %v162 = vpop.f32.mrf.mxu0
    %v163 = vadd.f32 %v136, %v162
    %v164 = vpop.f32.mrf.mxu0
    %165 = vdwg.mxu0
    %vm166 = vcmask 64512
    %167 = vst.msk [vmem:[#allocation7] sm:$0xff] %vm166, %v163
    // Predicated region
    $region38: #{tpu_custom_call.1} parent=1 // pred_check
      _
    $region39: #{tpu_custom_call.1} parent=1 // pred_check_branch
      %169 = sbr.rel (0) target = $region41
    $region40: #{tpu_custom_call.1} parent=1 // pred_region
      %171 = vsyncadd [#allocation4], 0
      %s173 = sshll.u32 [#allocation7], 4
      %s174 = int_to_ptr.vmem [resolvable:$true] %s173
      %s175 = sshll.u32 %s7, 4
      %s176 = int_to_ptr.hbm [resolvable:$true] %s175
      %178 = dma.vmem_to_hbm [thread:$0]  %s174, 128, %s176, [#allocation4]
    $region41: #{tpu_custom_call.1} parent=1 // pred_fallthru
      _
    // Predicated region
    $region42: #{tpu_custom_call.1} parent=1 // pred_check
      _
    $region43: #{tpu_custom_call.1} parent=1 // pred_check_branch
      %180 = sbr.rel (0) target = $region45
    $region44: #{tpu_custom_call.1} parent=1 // pred_region
      %182 = dma.done [#allocation4], 128
    $region45: #{tpu_custom_call.1} parent=1 // pred_fallthru
      _
    %183 = vsyncpa [#allocation3], 1
    %184 = vsyncpa [#allocation6], 1
    %185 = vsyncpa [#allocation4], 1

</llo_original>
